<compile_context>
chip_gen: v5e
topology: v5e:2x2
jax: 0.10.0
libtpu: 0.0.40
codegen_flags: <defaults>
</compile_context>

<pallas_src>
import functools
import math

import numpy as np
import jax
import jax.numpy as jnp
from jax.experimental import pallas as pl
from jax.experimental.pallas import tpu as pltpu

LANE = 128         # lane (last-dim) width of a vreg
SUBLANE_PAD = 16   # node-dim padding granularity (covers f32 (8,·) and bf16 (16,·) tiles)


def _round_up(n, m):
    return ((n + m - 1) // m) * m


def _vmem_capacity_bytes():
    """Physical per-core VMEM (128 MiB v5e/v6e, 64 MiB v7x); conservative fallback."""
    try:
        cap = getattr(pltpu.get_tpu_info(), "vmem_capacity_bytes", None)
        if cap:
            return int(cap)
    except Exception:
        pass
    return 64 * 1024 * 1024


def _vmem_limit(need_bytes, cap_bytes):
    """Scoped-VMEM limit: needed + headroom, clamped to ~85% of physical VMEM."""
    limit = int(need_bytes) + max(int(need_bytes) // 4, 8 * 1024 * 1024)
    limit = max(limit, 32 * 1024 * 1024)
    return int(min(limit, int(cap_bytes * 0.85)))


def _pad2(a, rows, cols, dtype=jnp.float32):
    a = jnp.asarray(a, jnp.float32)
    a = jnp.pad(a, ((0, rows - a.shape[0]), (0, cols - a.shape[1])))
    return a.astype(dtype)


# ---------------------------------------------------------------------------
# Shared per-layer math (used by both kernels).
#   wstar' = dt*step*0.5*(W+W^T)  (folded in the wrapper)
#   act    = relu(2*dt*X + (adj@X)@wstar')       == dt*relu(conv(X)+X)
#   Y_new  = (1-dt*alpha)*Y + act - dt*gamma*X
#   X_new  = X + dt*Y_new
# ---------------------------------------------------------------------------
def _layer_math(adj_t, x_full, x_t, y_t, wstar, *, c2x, c_y, c_x, dt):
    ax = jnp.dot(adj_t, x_full.astype(adj_t.dtype),
                 preferred_element_type=jnp.float32)
    axw = jnp.dot(ax.astype(wstar.dtype), wstar,
                  preferred_element_type=jnp.float32)
    act = jnp.maximum(c2x * x_t + axw, 0.0)
    y_new = act - c_x * x_t
    if c_y != 0.0:                      # static fold (c_y = 1 - dt*alpha)
        y_new = y_new + c_y * y_t
    x_new = x_t + dt * y_new
    return x_new, y_new


# ---------------------------------------------------------------------------
# Resident kernel: everything in VMEM, single grid point.
# ---------------------------------------------------------------------------
def _resident_kernel(x_ref, adj_ref, wenc_ref, benc_ref, wstar_ref,
                     wdec_ref, bdec_ref, out_ref,
                     *, nlayers, c2x, c_y, c_x, dt):
    adj = adj_ref[...]                 # bf16 or f32 (cast done in the wrapper)
    wstar = wstar_ref[...]

    # encoder + ReLU (dropout is identity in eval mode)
    y0 = jnp.maximum(
        jnp.dot(x_ref[...], wenc_ref[...], preferred_element_type=jnp.float32)
        + benc_ref[...], 0.0)

    def layer(_, carry):
        X, Y = carry
        return _layer_math(adj, X, X, Y, wstar, c2x=c2x, c_y=c_y, c_x=c_x, dt=dt)

    # Fully unroll small layer counts (scheduler visibility); real loop otherwise.
    X, _ = jax.lax.fori_loop(0, nlayers, layer, (y0, y0), unroll=nlayers <= 8)

    # decoder — lane-dense (Np, Cp) store; real nclass columns sliced outside.
    out_ref[...] = (jnp.dot(X, wdec_ref[...], preferred_element_type=jnp.float32)
                    + bdec_ref[...])


# ---------------------------------------------------------------------------
# Streamed kernel: adjacency row-tiles pipelined from HBM; X/Y in VMEM scratch.
# Grid = (nlayers + 2, num_row_tiles); phase 0 = encoder, nlayers+1 = decoder.
# ---------------------------------------------------------------------------
def _streamed_kernel(x_ref, adj_ref, wenc_ref, benc_ref, wstar_ref,
                     wdec_ref, bdec_ref, out_ref, xbuf_ref, ybuf_ref,
                     *, nlayers, tile_n, c2x, c_y, c_x, dt):
    p = pl.program_id(0)                          # phase
    r = pl.program_id(1)                          # node row-tile
    row0 = pl.multiple_of(r * tile_n, tile_n)
    rows = pl.ds(row0, tile_n)

    @pl.when(p == 0)
    def _encode():
        y0 = jnp.maximum(
            jnp.dot(x_ref[...], wenc_ref[...], preferred_element_type=jnp.float32)
            + benc_ref[...], 0.0)
        ybuf_ref[rows, :] = y0
        xbuf_ref[0, rows, :] = y0
        out_ref[...] = jnp.zeros(out_ref.shape, out_ref.dtype)

    def _do_layer(src, dst):            # src/dst are static ping-pong indices
        x_new, y_new = _layer_math(
            adj_ref[...], xbuf_ref[src], xbuf_ref[src, rows, :],
            ybuf_ref[rows, :], wstar_ref[...],
            c2x=c2x, c_y=c_y, c_x=c_x, dt=dt)
        ybuf_ref[rows, :] = y_new
        xbuf_ref[dst, rows, :] = x_new
        out_ref[...] = jnp.zeros(out_ref.shape, out_ref.dtype)

    layer_phase = (p >= 1) & (p <= nlayers)

    @pl.when(layer_phase & (jax.lax.rem(p - 1, 2) == 0))
    def _layer_even():
        _do_layer(0, 1)

    @pl.when(layer_phase & (jax.lax.rem(p - 1, 2) == 1))
    def _layer_odd():
        _do_layer(1, 0)

    @pl.when(p == nlayers + 1)
    def _decode():
        x_fin = xbuf_ref[nlayers % 2, rows, :]    # static buffer index
        out_ref[...] = (jnp.dot(x_fin, wdec_ref[...],
                                preferred_element_type=jnp.float32)
                        + bdec_ref[...])


# ---------------------------------------------------------------------------
# Wrappers
# ---------------------------------------------------------------------------
def _forward_resident(x, adj_norm, params, w_star_scaled, kernel_consts,
                      adj_dtype, wstar_dtype, nfeat_p, nhid_p, nclass_p, cap):
    N = x.shape[0]
    nclass = params["dec_w"].shape[0]
    n_p = _round_up(N, SUBLANE_PAD)
    nlayers = kernel_consts["nlayers"]

    x_p = _pad2(x, n_p, nfeat_p)
    adj_p = _pad2(adj_norm, n_p, n_p, adj_dtype)
    wenc_p = _pad2(params["enc_w"].T, nfeat_p, nhid_p)
    benc_p = _pad2(params["enc_b"].reshape(1, -1), 1, nhid_p)
    wstar_p = _pad2(w_star_scaled, nhid_p, nhid_p, wstar_dtype)
    wdec_p = _pad2(params["dec_w"].T, nhid_p, nclass_p)
    bdec_p = _pad2(params["dec_b"].reshape(1, -1), 1, nclass_p)

    operands = (x_p, adj_p, wenc_p, benc_p, wstar_p, wdec_p, bdec_p)
    in_bytes = sum(int(o.size) * o.dtype.itemsize for o in operands)
    out_bytes = n_p * nclass_p * 4

    flops = 2 * n_p * nfeat_p * nhid_p
    flops += nlayers * (2 * n_p * n_p * nhid_p + 2 * n_p * nhid_p * nhid_p
                        + 8 * n_p * nhid_p)
    flops += 2 * n_p * nhid_p * nclass_p

    # operands + output + live f32 temporaries (X, Y, ax/axw/act)
    vmem_need = in_bytes + out_bytes + 6 * n_p * nhid_p * 4

    kernel = functools.partial(_resident_kernel, **kernel_consts)
    vmem_spec = pl.BlockSpec(memory_space=pltpu.MemorySpace.VMEM)
    out_p = pl.pallas_call(
        kernel,
        out_shape=jax.ShapeDtypeStruct((n_p, nclass_p), jnp.float32),
        in_specs=[vmem_spec] * len(operands),
        out_specs=vmem_spec,
        compiler_params=pltpu.CompilerParams(
            vmem_limit_bytes=_vmem_limit(vmem_need, cap)),
        cost_estimate=pl.CostEstimate(flops=flops, transcendentals=0,
                                      bytes_accessed=in_bytes + out_bytes),
    )(*operands)
    # TODO(synk): on v7x, shard the node-row dimension across the two
    # TensorCores (dimension_semantics / pl.core_map) for large resident
    # graphs; a single grid point leaves the second core idle.
    return out_p[:N, :nclass]


def _forward_streamed(x, adj_norm, params, w_star_scaled, kernel_consts,
                      adj_dtype, wstar_dtype, nfeat_p, nhid_p, nclass_p, cap,
                      row_tile):
    N = x.shape[0]
    nclass = params["dec_w"].shape[0]
    nlayers = kernel_consts["nlayers"]

    tile_n = _round_up(min(int(row_tile), _round_up(N, SUBLANE_PAD)), SUBLANE_PAD)
    n_p = _round_up(N, tile_n)
    n_tiles = n_p // tile_n

    x_p = _pad2(x, n_p, nfeat_p)
    adj_p = _pad2(adj_norm, n_p, n_p, adj_dtype)
    wenc_p = _pad2(params["enc_w"].T, nfeat_p, nhid_p)
    benc_p = _pad2(params["enc_b"].reshape(1, -1), 1, nhid_p)
    wstar_p = _pad2(w_star_scaled, nhid_p, nhid_p, wstar_dtype)
    wdec_p = _pad2(params["dec_w"].T, nhid_p, nclass_p)
    bdec_p = _pad2(params["dec_b"].reshape(1, -1), 1, nclass_p)

    def x_map(p, r):            # fetch row tiles only during the encoder phase
        return (jnp.where(p == 0, r, 0), 0)

    def adj_map(p, r):          # stream row tiles only during layer phases
        return (jnp.where((p >= 1) & (p <= nlayers), r, 0), 0)

    def const_map(p, r):        # weights fetched once
        return (0, 0)

    in_specs = [
        pl.BlockSpec((tile_n, nfeat_p), x_map),
        pl.BlockSpec((tile_n, n_p), adj_map),
        pl.BlockSpec((nfeat_p, nhid_p), const_map),
        pl.BlockSpec((1, nhid_p), const_map),
        pl.BlockSpec((nhid_p, nhid_p), const_map),
        pl.BlockSpec((nhid_p, nclass_p), const_map),
        pl.BlockSpec((1, nclass_p), const_map),
    ]
    out_spec = pl.BlockSpec((tile_n, nclass_p), lambda p, r: (r, 0))

    scratch = [pltpu.VMEM((2, n_p, nhid_p), jnp.float32),   # X ping-pong state
               pltpu.VMEM((n_p, nhid_p), jnp.float32)]      # Y state

    adj_item = np.dtype(adj_dtype).itemsize
    wstar_item = np.dtype(wstar_dtype).itemsize

    flops = 2 * n_p * nfeat_p * nhid_p
    flops += nlayers * (2 * n_p * n_p * nhid_p + 2 * n_p * nhid_p * nhid_p
                        + 8 * n_p * nhid_p)
    flops += 2 * n_p * nhid_p * nclass_p
    bytes_accessed = (n_p * nfeat_p * 4
                      + nlayers * n_p * n_p * adj_item          # adj streamed per layer
                      + int(wenc_p.size) * 4 + int(wstar_p.size) * wstar_item
                      + int(wdec_p.size) * 4 + (nhid_p + nclass_p) * 4
                      + (nlayers + 2) * n_p * nclass_p * 4)     # out written each phase

    vmem_need = (3 * n_p * nhid_p * 4                            # X (x2) + Y scratch
                 + 2 * tile_n * n_p * adj_item                   # adj tile (double-buffered)
                 + 2 * tile_n * nfeat_p * 4 + 2 * tile_n * nclass_p * 4
                 + 2 * (int(wenc_p.size) * 4 + int(wstar_p.size) * wstar_item
                        + int(wdec_p.size) * 4 + (nhid_p + nclass_p) * 4)
                 + 4 * tile_n * nhid_p * 4)                      # ax/axw/act temporaries

    kernel = functools.partial(_streamed_kernel, tile_n=tile_n, **kernel_consts)
    out_p = pl.pallas_call(
        kernel,
        out_shape=jax.ShapeDtypeStruct((n_p, nclass_p), jnp.float32),
        grid=(nlayers + 2, n_tiles),
        in_specs=in_specs,
        out_specs=out_spec,
        scratch_shapes=scratch,
        compiler_params=pltpu.CompilerParams(
            # Both axes carry state through VMEM scratch -> sequential.
            dimension_semantics=("arbitrary", "arbitrary"),
            vmem_limit_bytes=_vmem_limit(vmem_need, cap)),
        cost_estimate=pl.CostEstimate(flops=flops, transcendentals=0,
                                      bytes_accessed=int(bytes_accessed)),
    )(x_p, adj_p, wenc_p, benc_p, wstar_p, wdec_p, bdec_p)
    # TODO(synk): v7x dual-TensorCore split of the row-tile axis (requires the
    # X state to be exchanged via VMEM_SHARED/CMEM + core_barrier per layer).
    return out_p[:N, :nclass]


def graphcon_graff_forward(x, adj_norm, params, *, nlayers, step_size,
                           dt=1.0, alpha=1.0, gamma=1.0,
                           use_bf16_adj=True, use_bf16_wstar=True,
                           force_streamed=False, row_tile=256):
    """Fold scalars, pick resident/streamed path by VMEM capacity, call the kernel."""
    if dt <= 0.0:
        raise ValueError("dt must be > 0 (dt is folded into the ReLU argument)")

    N, nfeat = x.shape
    nhid = params["enc_w"].shape[0]
    nclass = params["dec_w"].shape[0]

    nfeat_p = _round_up(nfeat, LANE)
    nhid_p = _round_up(nhid, LANE)       # 129..256 pads straight to 256 (full MXU width on v6e/v7x)
    nclass_p = _round_up(nclass, LANE)

    adj_dtype = jnp.bfloat16 if use_bf16_adj else jnp.float32
    wstar_dtype = jnp.bfloat16 if use_bf16_wstar else jnp.float32

    # Fold dt*step_size into the symmetrized GRAFF weight (done once, outside).
    w_star_scaled = (0.5 * float(dt) * float(step_size)) * (
        params["conv_w"] + params["conv_w"].T)

    kernel_consts = dict(nlayers=int(nlayers), dt=float(dt),
                         c2x=float(2.0 * dt),
                         c_y=float(1.0 - dt * alpha), c_x=float(dt * gamma))

    cap = _vmem_capacity_bytes()

    # Capacity gate for the fully VMEM-resident path (v7x: 64 MiB per core).
    n_res = _round_up(N, SUBLANE_PAD)
    resident_need = (
        n_res * n_res * np.dtype(adj_dtype).itemsize                  # adjacency
        + n_res * nfeat_p * 4 + n_res * nclass_p * 4                  # x, out
        + nfeat_p * nhid_p * 4 + nhid_p * nclass_p * 4
        + nhid_p * nhid_p * np.dtype(wstar_dtype).itemsize
        + (nhid_p + nclass_p) * 4
        + 6 * n_res * nhid_p * 4)                                     # X/Y/temporaries

    if force_streamed or resident_need > int(cap * 0.8):
        return _forward_streamed(x, adj_norm, params, w_star_scaled,
                                 kernel_consts, adj_dtype, wstar_dtype,
                                 nfeat_p, nhid_p, nclass_p, cap, row_tile)
    return _forward_resident(x, adj_norm, params, w_star_scaled,
                             kernel_consts, adj_dtype, wstar_dtype,
                             nfeat_p, nhid_p, nclass_p, cap)


# ---------------------------------------------------------------------------
# Plain-JAX helpers: adjacency normalization, reference forward, params.
# ---------------------------------------------------------------------------
def sym_norm_adj(A):
    """D_tilde^{-1/2} (A + I) D_tilde^{-1/2} (dense), matching the torch code."""
    n = A.shape[0]
    A_tilde = A + jnp.eye(n, dtype=A.dtype)
    deg = jnp.sum(A_tilde, axis=0)
    d_inv_sqrt = jnp.where(deg > 0, 1.0 / jnp.sqrt(deg), 0.0)
    return d_inv_sqrt[:, None] * A_tilde * d_inv_sqrt[None, :]


def reference_forward(x, adj_norm, params, *, nlayers, step_size,
                      dt=1.0, alpha=1.0, gamma=1.0):
    w_star = 0.5 * (params["conv_w"] + params["conv_w"].T)
    Y = jax.nn.relu(x @ params["enc_w"].T + params["enc_b"])
    X = Y
    for _ in range(nlayers):
        conv = X + step_size * (adj_norm @ X) @ w_star
        Y = Y + dt * (jax.nn.relu(conv + X) - alpha * Y - gamma * X)
        X = X + dt * Y
    return X @ params["dec_w"].T + params["dec_b"]


def make_params(key, nfeat, nhid, nclass):
    stdv = 1.0 / math.sqrt(nhid)
    ks = jax.random.split(key, 5)
    return {
        "enc_w": jax.random.uniform(ks[0], (nhid, nfeat), jnp.float32, -stdv, stdv),
        "conv_w": jax.random.uniform(ks[1], (nhid, nhid), jnp.float32, -stdv, stdv),
        "dec_w": jax.random.uniform(ks[2], (nclass, nhid), jnp.float32, -stdv, stdv),
        "enc_b": jax.random.uniform(ks[3], (nhid,), jnp.float32, -stdv, stdv),
        "dec_b": jax.random.uniform(ks[4], (nclass,), jnp.float32, -stdv, stdv),
        # self.res exists in the module but is unused by forward(); omitted.
    }


def _make_graph(key, n, nfeat, p_edge):
    k_x, k_a = jax.random.split(key)
    x = jax.random.normal(k_x, (n, nfeat), jnp.float32)
    upper = (jax.random.uniform(k_a, (n, n)) < p_edge).astype(jnp.float32)
    A = jnp.triu(upper, k=1)
    A = A + A.T
    return x, sym_norm_adj(A)


def _rel_err(a, b):
    return float(jnp.linalg.norm(a - b) / (jnp.linalg.norm(b) + 1e-12))


if __name__ == "__main__":
    NFEAT, NHID, NCLASS = 16, 32, 8
    hp = dict(nlayers=3, step_size=0.5, dt=1.0, alpha=1.0, gamma=1.0)
    # TODO(synk): F.dropout with training=True (stochastic) is not modeled;
    # eval-mode (identity) semantics are implemented.

    key = jax.random.PRNGKey(0)
    k_small, k_big, k_p = jax.random.split(key, 3)
    params = make_params(k_p, NFEAT, NHID, NCLASS)

    # --- small graph: resident (fully VMEM) path ----------------------------
    x_s, adj_s = _make_graph(k_small, 64, NFEAT, 0.1)
    ref_s = reference_forward(x_s, adj_s, params, **hp)

    out = jax.block_until_ready(graphcon_graff_forward(
        x_s, adj_s, params, **hp, use_bf16_adj=False, use_bf16_wstar=False))
    assert out.shape == (64, NCLASS)
    assert jnp.allclose(out, ref_s, atol=1e-4, rtol=1e-4), "resident f32 mismatch"

    out = jax.block_until_ready(graphcon_graff_forward(
        x_s, adj_s, params, **hp, use_bf16_adj=True, use_bf16_wstar=True))
    assert out.shape == (64, NCLASS)
    assert _rel_err(out, ref_s) < 5e-2, "resident bf16 mismatch"

    # --- larger graph: forced streamed path (adj row-tiles pipelined from HBM)
    x_b, adj_b = _make_graph(k_big, 256, NFEAT, 0.05)
    ref_b = reference_forward(x_b, adj_b, params, **hp)

    out = jax.block_until_ready(graphcon_graff_forward(
        x_b, adj_b, params, **hp, use_bf16_adj=False, use_bf16_wstar=False,
        force_streamed=True, row_tile=128))
    assert out.shape == (256, NCLASS)
    assert jnp.allclose(out, ref_b, atol=2e-4, rtol=2e-4), "streamed f32 mismatch"

    out = jax.block_until_ready(graphcon_graff_forward(
        x_b, adj_b, params, **hp, use_bf16_adj=True, use_bf16_wstar=True,
        force_streamed=True, row_tile=128))
    assert out.shape == (256, NCLASS)
    assert _rel_err(out, ref_b) < 5e-2, "streamed bf16 mismatch"

    print("KERNEL_OK")
</pallas_src>

<mosaic_0001>
module attributes {stable_mosaic.version = 11 : i64} {
  func.func @_resident_kernel(%arg0: memref<64x128xf32, #tpu.memory_space<vmem>>, %arg1: memref<64x64xf32, #tpu.memory_space<vmem>>, %arg2: memref<128x128xf32, #tpu.memory_space<vmem>>, %arg3: memref<1x128xf32, #tpu.memory_space<vmem>>, %arg4: memref<128x128xf32, #tpu.memory_space<vmem>>, %arg5: memref<128x128xf32, #tpu.memory_space<vmem>>, %arg6: memref<1x128xf32, #tpu.memory_space<vmem>>, %arg7: memref<64x128xf32, #tpu.memory_space<vmem>>) attributes {dimension_semantics = [], scalar_prefetch = 0 : i64, scratch_operands = 0 : i64, tpu.core_type = #tpu.core_type<tc>} {
    %c0 = arith.constant 0 : index
    %c0_0 = arith.constant 0 : index
    %0 = vector.load %arg1[%c0, %c0_0] : memref<64x64xf32, #tpu.memory_space<vmem>>, vector<64x64xf32>
    %c0_1 = arith.constant 0 : index
    %c0_2 = arith.constant 0 : index
    %1 = vector.load %arg4[%c0_1, %c0_2] : memref<128x128xf32, #tpu.memory_space<vmem>>, vector<128x128xf32>
    %c0_3 = arith.constant 0 : index
    %c0_4 = arith.constant 0 : index
    %2 = vector.load %arg0[%c0_3, %c0_4] : memref<64x128xf32, #tpu.memory_space<vmem>>, vector<64x128xf32>
    %c0_5 = arith.constant 0 : index
    %c0_6 = arith.constant 0 : index
    %3 = vector.load %arg2[%c0_5, %c0_6] : memref<128x128xf32, #tpu.memory_space<vmem>>, vector<128x128xf32>
    %cst = arith.constant dense<0.000000e+00> : vector<64x128xf32>
    %4 = tpu.matmul %2, %3, %cst {dimension_numbers = #tpu.dot_dimension_numbers<[1], [0], [0], [1], [0, 0, 1, 1], [], []>} : vector<64x128xf32>, vector<128x128xf32>, vector<64x128xf32> -> vector<64x128xf32>
    %c0_7 = arith.constant 0 : index
    %c0_8 = arith.constant 0 : index
    %5 = vector.load %arg3[%c0_7, %c0_8] : memref<1x128xf32, #tpu.memory_space<vmem>>, vector<1x128xf32>
    %6 = vector.broadcast %5 : vector<1x128xf32> to vector<64x128xf32>
    %7 = arith.addf %4, %6 : vector<64x128xf32>
    %cst_9 = arith.constant 0.000000e+00 : f32
    %8 = vector.broadcast %cst_9 : f32 to vector<64x128xf32>
    %9 = arith.maximumf %7, %8 : vector<64x128xf32>
    %c0_i32 = arith.constant 0 : i32
    %cst_10 = arith.constant dense<0.000000e+00> : vector<64x128xf32>
    %10 = tpu.matmul %0, %9, %cst_10 {dimension_numbers = #tpu.dot_dimension_numbers<[1], [0], [0], [1], [0, 0, 1, 1], [], []>} : vector<64x64xf32>, vector<64x128xf32>, vector<64x128xf32> -> vector<64x128xf32>
    %cst_11 = arith.constant dense<0.000000e+00> : vector<64x128xf32>
    %11 = tpu.matmul %10, %1, %cst_11 {dimension_numbers = #tpu.dot_dimension_numbers<[1], [0], [0], [1], [0, 0, 1, 1], [], []>} : vector<64x128xf32>, vector<128x128xf32>, vector<64x128xf32> -> vector<64x128xf32>
    %cst_12 = arith.constant 2.000000e+00 : f32
    %12 = vector.broadcast %cst_12 : f32 to vector<64x128xf32>
    %13 = arith.mulf %12, %9 : vector<64x128xf32>
    %14 = arith.addf %13, %11 : vector<64x128xf32>
    %cst_13 = arith.constant 0.000000e+00 : f32
    %15 = vector.broadcast %cst_13 : f32 to vector<64x128xf32>
    %16 = arith.maximumf %14, %15 : vector<64x128xf32>
    %cst_14 = arith.constant 1.000000e+00 : f32
    %17 = vector.broadcast %cst_14 : f32 to vector<64x128xf32>
    %18 = arith.mulf %17, %9 : vector<64x128xf32>
    %19 = arith.subf %16, %18 : vector<64x128xf32>
    %cst_15 = arith.constant 1.000000e+00 : f32
    %20 = vector.broadcast %cst_15 : f32 to vector<64x128xf32>
    %21 = arith.mulf %20, %19 : vector<64x128xf32>
    %22 = arith.addf %9, %21 : vector<64x128xf32>
    %c1_i32 = arith.constant 1 : i32
    %cst_16 = arith.constant dense<0.000000e+00> : vector<64x128xf32>
    %23 = tpu.matmul %0, %22, %cst_16 {dimension_numbers = #tpu.dot_dimension_numbers<[1], [0], [0], [1], [0, 0, 1, 1], [], []>} : vector<64x64xf32>, vector<64x128xf32>, vector<64x128xf32> -> vector<64x128xf32>
    %cst_17 = arith.constant dense<0.000000e+00> : vector<64x128xf32>
    %24 = tpu.matmul %23, %1, %cst_17 {dimension_numbers = #tpu.dot_dimension_numbers<[1], [0], [0], [1], [0, 0, 1, 1], [], []>} : vector<64x128xf32>, vector<128x128xf32>, vector<64x128xf32> -> vector<64x128xf32>
    %cst_18 = arith.constant 2.000000e+00 : f32
    %25 = vector.broadcast %cst_18 : f32 to vector<64x128xf32>
    %26 = arith.mulf %25, %22 : vector<64x128xf32>
    %27 = arith.addf %26, %24 : vector<64x128xf32>
    %cst_19 = arith.constant 0.000000e+00 : f32
    %28 = vector.broadcast %cst_19 : f32 to vector<64x128xf32>
    %29 = arith.maximumf %27, %28 : vector<64x128xf32>
    %cst_20 = arith.constant 1.000000e+00 : f32
    %30 = vector.broadcast %cst_20 : f32 to vector<64x128xf32>
    %31 = arith.mulf %30, %22 : vector<64x128xf32>
    %32 = arith.subf %29, %31 : vector<64x128xf32>
    %cst_21 = arith.constant 1.000000e+00 : f32
    %33 = vector.broadcast %cst_21 : f32 to vector<64x128xf32>
    %34 = arith.mulf %33, %32 : vector<64x128xf32>
    %35 = arith.addf %22, %34 : vector<64x128xf32>
    %c2_i32 = arith.constant 2 : i32
    %cst_22 = arith.constant dense<0.000000e+00> : vector<64x128xf32>
    %36 = tpu.matmul %0, %35, %cst_22 {dimension_numbers = #tpu.dot_dimension_numbers<[1], [0], [0], [1], [0, 0, 1, 1], [], []>} : vector<64x64xf32>, vector<64x128xf32>, vector<64x128xf32> -> vector<64x128xf32>
    %cst_23 = arith.constant dense<0.000000e+00> : vector<64x128xf32>
    %37 = tpu.matmul %36, %1, %cst_23 {dimension_numbers = #tpu.dot_dimension_numbers<[1], [0], [0], [1], [0, 0, 1, 1], [], []>} : vector<64x128xf32>, vector<128x128xf32>, vector<64x128xf32> -> vector<64x128xf32>
    %cst_24 = arith.constant 2.000000e+00 : f32
    %38 = vector.broadcast %cst_24 : f32 to vector<64x128xf32>
    %39 = arith.mulf %38, %35 : vector<64x128xf32>
    %40 = arith.addf %39, %37 : vector<64x128xf32>
    %cst_25 = arith.constant 0.000000e+00 : f32
    %41 = vector.broadcast %cst_25 : f32 to vector<64x128xf32>
    %42 = arith.maximumf %40, %41 : vector<64x128xf32>
    %cst_26 = arith.constant 1.000000e+00 : f32
    %43 = vector.broadcast %cst_26 : f32 to vector<64x128xf32>
    %44 = arith.mulf %43, %35 : vector<64x128xf32>
    %45 = arith.subf %42, %44 : vector<64x128xf32>
    %cst_27 = arith.constant 1.000000e+00 : f32
    %46 = vector.broadcast %cst_27 : f32 to vector<64x128xf32>
    %47 = arith.mulf %46, %45 : vector<64x128xf32>
    %48 = arith.addf %35, %47 : vector<64x128xf32>
    %c0_28 = arith.constant 0 : index
    %c0_29 = arith.constant 0 : index
    %49 = vector.load %arg5[%c0_28, %c0_29] : memref<128x128xf32, #tpu.memory_space<vmem>>, vector<128x128xf32>
    %cst_30 = arith.constant dense<0.000000e+00> : vector<64x128xf32>
    %50 = tpu.matmul %48, %49, %cst_30 {dimension_numbers = #tpu.dot_dimension_numbers<[1], [0], [0], [1], [0, 0, 1, 1], [], []>} : vector<64x128xf32>, vector<128x128xf32>, vector<64x128xf32> -> vector<64x128xf32>
    %c0_31 = arith.constant 0 : index
    %c0_32 = arith.constant 0 : index
    %51 = vector.load %arg6[%c0_31, %c0_32] : memref<1x128xf32, #tpu.memory_space<vmem>>, vector<1x128xf32>
    %52 = vector.broadcast %51 : vector<1x128xf32> to vector<64x128xf32>
    %53 = arith.addf %50, %52 : vector<64x128xf32>
    %c0_33 = arith.constant 0 : index
    %c0_34 = arith.constant 0 : index
    %54 = vector.load %arg7[%c0_33, %c0_34] : memref<64x128xf32, #tpu.memory_space<vmem>>, vector<64x128xf32>
    tpu.vector_store %arg7[%c0_33, %c0_34], %53 {strides = array<i32>} : memref<64x128xf32, #tpu.memory_space<vmem>>, vector<64x128xf32>,
    return
  }
}

</mosaic_0001>

<llo_original>
// kernel: tpu_custom_call.1
$region0: #{tpu_custom_call.1}
  #allocation0 [shape = 'u32[]', space=smem, size = 0x4, offset = 0x4, fixed_abs, tag = 'smem constant byte address 0x4 - core index']
  #allocation1 [shape = 'u32[72,128]{1,0:T(1,128)}', space=vmem, size = 0x9000, scoped, tag = 'internal scratch']
  %s0 = inlined_call_operand.hbm [shape: f32[64,128], index: 0, kind: input, shape index: {}]
  %s1 = inlined_call_operand.hbm [shape: f32[64,64], index: 1, kind: input, shape index: {}]
  %s2 = inlined_call_operand.hbm [shape: f32[128,128], index: 2, kind: input, shape index: {}]
  %s3 = inlined_call_operand.vmem [shape: f32[1,128], index: 3, kind: input, shape index: {}]
  %s4 = inlined_call_operand.hbm [shape: f32[128,128], index: 4, kind: input, shape index: {}]
  %s5 = inlined_call_operand.hbm [shape: f32[128,128], index: 5, kind: input, shape index: {}]
  %s6 = inlined_call_operand.vmem [shape: f32[1,128], index: 6, kind: input, shape index: {}]
  %s7 = inlined_call_operand.hbm [shape: f32[64,128], index: 7, kind: output, shape index: {}]
  %s8 = sld [smem:[#allocation0]]
  $region58: #{tpu_custom_call.1} parent=0
    _
  %s10 = ssub.s32 1, %s8
  %s11 = scalar_select 0, %s10, %s8
  $region1: #{tpu_custom_call.1} parent=0
    #allocation2 [shape = 'u8[32768]{0}', space=vmem, size = 0x8000, scoped, tag = 'input window, operand 0, single buffered']
    #allocation3 [shape = 's32[1]{0}', space=sflag, size = 0x4, scoped, tag = 'scoped memory for tpu_custom_call.1']
    #allocation4 [shape = 's32[1]{0}', space=sflag, size = 0x4, scoped, tag = 'scoped memory for tpu_custom_call.1']
    #allocation5 [shape = 'u8[32768]{0}', space=vmem, size = 0x8000, scoped, tag = 'input window, operand 1, single buffered']
    #allocation6 [shape = 's32[1]{0}', space=sflag, size = 0x4, scoped, tag = 'scoped memory for tpu_custom_call.1']
    #allocation7 [shape = 'u8[65536]{0}', space=vmem, size = 0x10000, scoped, tag = 'input window, operand 2, single buffered']
    #allocation8 [shape = 'u8[65536]{0}', space=vmem, size = 0x10000, scoped, tag = 'input window, operand 4, single buffered']
    #allocation9 [shape = 's32[1]{0}', space=sflag, size = 0x4, scoped, tag = 'scoped memory for tpu_custom_call.1']
    #allocation10 [shape = 'u8[65536]{0}', space=vmem, size = 0x10000, scoped, tag = 'input window, operand 5, single buffered']
    #allocation11 [shape = 'u8[32768]{0}', space=vmem, size = 0x8000, scoped, tag = 'output window, operand 0, single buffered']
    %12 = vsyncpa [#allocation3], 0
    %13 = vsyncpa [#allocation6], 0
    %14 = vsyncpa [#allocation9], 0
    %15 = vsyncpa [#allocation4], 0
    // Predicated region
    $region2: #{tpu_custom_call.1} parent=1 // pred_check
      _
    $region3: #{tpu_custom_call.1} parent=1 // pred_check_branch
      %17 = sbr.rel (0) target = $region5
    $region4: #{tpu_custom_call.1} parent=1 // pred_region
      %19 = vsyncadd [#allocation3], 0
      %s20 = sshll.u32 %s0, 4
      %s21 = int_to_ptr.hbm [resolvable:$true] %s20
      %s22 = sshll.u32 [#allocation2], 4
      %s23 = int_to_ptr.vmem [resolvable:$true] %s22
      %28 = dma.hbm_to_vmem [thread:$0]  %s21, 1024, %s23, [#allocation3], 128, 128, 8
    $region5: #{tpu_custom_call.1} parent=1 // pred_fallthru
      _
    // Predicated region
    $region6: #{tpu_custom_call.1} parent=1 // pred_check
      _
    $region7: #{tpu_custom_call.1} parent=1 // pred_check_branch
      %30 = sbr.rel (0) target = $region9
    $region8: #{tpu_custom_call.1} parent=1 // pred_region
      %32 = vsyncadd [#allocation6], 0
      %s33 = sshll.u32 %s1, 4
      %s34 = int_to_ptr.hbm [resolvable:$true] %s33
      %s35 = sshll.u32 [#allocation5], 4
      %s36 = int_to_ptr.vmem [resolvable:$true] %s35
      %41 = dma.hbm_to_vmem [thread:$0]  %s34, 1024, %s36, [#allocation6], 128, 128, 8
    $region9: #{tpu_custom_call.1} parent=1 // pred_fallthru
      _
    // Predicated region
    $region10: #{tpu_custom_call.1} parent=1 // pred_check
      _
    $region11: #{tpu_custom_call.1} parent=1 // pred_check_branch
      %43 = sbr.rel (0) target = $region13
    $region12: #{tpu_custom_call.1} parent=1 // pred_region
      %45 = vsyncadd [#allocation6], 0
      %s46 = sshll.u32 %s2, 4
      %s47 = int_to_ptr.hbm [resolvable:$true] %s46
      %s48 = sshll.u32 [#allocation7], 4
      %s49 = int_to_ptr.vmem [resolvable:$true] %s48
      %54 = dma.hbm_to_vmem [thread:$0]  %s47, 2048, %s49, [#allocation6], 128, 128, 8
    $region13: #{tpu_custom_call.1} parent=1 // pred_fallthru
      _
    // Predicated region
    $region14: #{tpu_custom_call.1} parent=1 // pred_check
      _
    $region15: #{tpu_custom_call.1} parent=1 // pred_check_branch
      %56 = sbr.rel (0) target = $region17
    $region16: #{tpu_custom_call.1} parent=1 // pred_region
      _
    $region17: #{tpu_custom_call.1} parent=1 // pred_fallthru
      _
    // Predicated region
    $region18: #{tpu_custom_call.1} parent=1 // pred_check
      _
    $region19: #{tpu_custom_call.1} parent=1 // pred_check_branch
      %58 = sbr.rel (0) target = $region21
    $region20: #{tpu_custom_call.1} parent=1 // pred_region
      %60 = vsyncadd [#allocation9], 0
      %s61 = sshll.u32 %s4, 4
      %s62 = int_to_ptr.hbm [resolvable:$true] %s61
      %s63 = sshll.u32 [#allocation8], 4
      %s64 = int_to_ptr.vmem [resolvable:$true] %s63
      %69 = dma.hbm_to_vmem [thread:$0]  %s62, 2048, %s64, [#allocation9], 128, 128, 8
    $region21: #{tpu_custom_call.1} parent=1 // pred_fallthru
      _
    // Predicated region
    $region22: #{tpu_custom_call.1} parent=1 // pred_check
      _
    $region23: #{tpu_custom_call.1} parent=1 // pred_check_branch
      %71 = sbr.rel (0) target = $region25
    $region24: #{tpu_custom_call.1} parent=1 // pred_region
      %73 = vsyncadd [#allocation9], 0
      %s74 = sshll.u32 %s5, 4
      %s75 = int_to_ptr.hbm [resolvable:$true] %s74
      %s76 = sshll.u32 [#allocation10], 4
      %s77 = int_to_ptr.vmem [resolvable:$true] %s76
      %82 = dma.hbm_to_vmem [thread:$0]  %s75, 2048, %s77, [#allocation9], 128, 128, 8
    $region25: #{tpu_custom_call.1} parent=1 // pred_fallthru
      _
    // Predicated region
    $region26: #{tpu_custom_call.1} parent=1 // pred_check
      _
    $region27: #{tpu_custom_call.1} parent=1 // pred_check_branch
      %84 = sbr.rel (0) target = $region29
    $region28: #{tpu_custom_call.1} parent=1 // pred_region
      _
    $region29: #{tpu_custom_call.1} parent=1 // pred_fallthru
      _
    // Predicated region
    $region30: #{tpu_custom_call.1} parent=1 // pred_check
      _
    $region31: #{tpu_custom_call.1} parent=1 // pred_check_branch
      %86 = sbr.rel (0) target = $region33
    $region32: #{tpu_custom_call.1} parent=1 // pred_region
      %88 = dma.done [#allocation3], 1024
    $region33: #{tpu_custom_call.1} parent=1 // pred_fallthru
      _
    // Predicated region
    $region34: #{tpu_custom_call.1} parent=1 // pred_check
      _
    $region35: #{tpu_custom_call.1} parent=1 // pred_check_branch
      %90 = sbr.rel (0) target = $region37
    $region36: #{tpu_custom_call.1} parent=1 // pred_region
      %92 = dma.done [#allocation6], 1024
    $region37: #{tpu_custom_call.1} parent=1 // pred_fallthru
      _
    // Predicated region
    $region38: #{tpu_custom_call.1} parent=1 // pred_check
      _
    $region39: #{tpu_custom_call.1} parent=1 // pred_check_branch
      %94 = sbr.rel (0) target = $region41
    $region40: #{tpu_custom_call.1} parent=1 // pred_region
      %96 = dma.done [#allocation6], 2048
    $region41: #{tpu_custom_call.1} parent=1 // pred_fallthru
      _
    // Predicated region
    $region42: #{tpu_custom_call.1} parent=1 // pred_check
      _
    $region43: #{tpu_custom_call.1} parent=1 // pred_check_branch
      %98 = sbr.rel (0) target = $region45
    $region44: #{tpu_custom_call.1} parent=1 // pred_region
      %100 = dma.done [#allocation9], 2048
    $region45: #{tpu_custom_call.1} parent=1 // pred_fallthru
      _
    // Predicated region
    $region46: #{tpu_custom_call.1} parent=1 // pred_check
      _
    $region47: #{tpu_custom_call.1} parent=1 // pred_check_branch
      %102 = sbr.rel (0) target = $region49
    $region48: #{tpu_custom_call.1} parent=1 // pred_region
      %104 = dma.done [#allocation9], 2048
    $region49: #{tpu_custom_call.1} parent=1 // pred_fallthru
      _
    %v105 = vld [vmem:[#allocation5] sm:$0xff]
    %v106 = vld [vmem:[#allocation5 + $0x8] sm:$0xff]
    %v107 = vld [vmem:[#allocation5 + $0x10] sm:$0xff]
    %v108 = vld [vmem:[#allocation5 + $0x18] sm:$0xff]
    %v109 = vld [vmem:[#allocation5 + $0x20] sm:$0xff]
    %v110 = vld [vmem:[#allocation5 + $0x28] sm:$0xff]
    %v111 = vld [vmem:[#allocation5 + $0x30] sm:$0xff]
    %v112 = vld [vmem:[#allocation5 + $0x38] sm:$0xff]
    %v113 = vld [vmem:[#allocation8] sm:$0xff]
    %v114 = vld [vmem:[#allocation8 + $0x8] sm:$0xff]
    %v115 = vld [vmem:[#allocation8 + $0x10] sm:$0xff]
    %v116 = vld [vmem:[#allocation8 + $0x18] sm:$0xff]
    %v117 = vld [vmem:[#allocation8 + $0x20] sm:$0xff]
    %v118 = vld [vmem:[#allocation8 + $0x28] sm:$0xff]
    %v119 = vld [vmem:[#allocation8 + $0x30] sm:$0xff]
    %v120 = vld [vmem:[#allocation8 + $0x38] sm:$0xff]
    %v121 = vld [vmem:[#allocation8 + $0x40] sm:$0xff]
    %v122 = vld [vmem:[#allocation8 + $0x48] sm:$0xff]
    %v123 = vld [vmem:[#allocation8 + $0x50] sm:$0xff]
    %v124 = vld [vmem:[#allocation8 + $0x58] sm:$0xff]
    %v125 = vld [vmem:[#allocation8 + $0x60] sm:$0xff]
    %v126 = vld [vmem:[#allocation8 + $0x68] sm:$0xff]
    %v127 = vld [vmem:[#allocation8 + $0x70] sm:$0xff]
    %v128 = vld [vmem:[#allocation8 + $0x78] sm:$0xff]
    %v129 = vld [vmem:[#allocation2] sm:$0xff]
    %v130 = vld [vmem:[#allocation2 + $0x8] sm:$0xff]
    %v131 = vld [vmem:[#allocation2 + $0x10] sm:$0xff]
    %v132 = vld [vmem:[#allocation2 + $0x18] sm:$0xff]
    %v133 = vld [vmem:[#allocation2 + $0x20] sm:$0xff]
    %v134 = vld [vmem:[#allocation2 + $0x28] sm:$0xff]
    %v135 = vld [vmem:[#allocation2 + $0x30] sm:$0xff]
    %v136 = vld [vmem:[#allocation2 + $0x38] sm:$0xff]
    %v137 = vld [vmem:[#allocation7] sm:$0xff]
    %v138 = vld [vmem:[#allocation7 + $0x8] sm:$0xff]
    %v139 = vld [vmem:[#allocation7 + $0x10] sm:$0xff]
    %v140 = vld [vmem:[#allocation7 + $0x18] sm:$0xff]
    %v141 = vld [vmem:[#allocation7 + $0x20] sm:$0xff]
    %v142 = vld [vmem:[#allocation7 + $0x28] sm:$0xff]
    %v143 = vld [vmem:[#allocation7 + $0x30] sm:$0xff]
    %v144 = vld [vmem:[#allocation7 + $0x38] sm:$0xff]
    %v145 = vld [vmem:[#allocation7 + $0x40] sm:$0xff]
    %v146 = vld [vmem:[#allocation7 + $0x48] sm:$0xff]
    %v147 = vld [vmem:[#allocation7 + $0x50] sm:$0xff]
    %v148 = vld [vmem:[#allocation7 + $0x58] sm:$0xff]
    %v149 = vld [vmem:[#allocation7 + $0x60] sm:$0xff]
    %v150 = vld [vmem:[#allocation7 + $0x68] sm:$0xff]
    %v151 = vld [vmem:[#allocation7 + $0x70] sm:$0xff]
    %v152 = vld [vmem:[#allocation7 + $0x78] sm:$0xff]
    %v153 = vld [vmem:[%s3] sm:$0x1]
    %v155 = vperm.slane %v153, 0
    %157 = vmatpush.msra.mxu0 %v152
    %158 = vmatpush.msra.mxu0 %v151
    %159 = vmatpush.msra.mxu0 %v150
    %160 = vmatpush.msra.mxu0 %v149
    %161 = vmatpush.msra.mxu0 %v148
    %162 = vmatpush.msra.mxu0 %v147
    %163 = vmatpush.msra.mxu0 %v146
    %164 = vmatpush.msra.mxu0 %v145
    %165 = vmatpush.msra.mxu0 %v144
    %166 = vmatpush.msra.mxu0 %v143
    %167 = vmatpush.msra.mxu0 %v142
    %168 = vmatpush.msra.mxu0 %v141
    %169 = vmatpush.msra.mxu0 %v140
    %170 = vmatpush.msra.mxu0 %v139
    %171 = vmatpush.msra.mxu0 %v138
    %172 = vmatpush.msra.mxu0 %v137
    %173 = vmatmul.f32.gmra.mxu0 %v129
    %v174 = vpop.f32.mrf.mxu0
    %v175 = vadd.f32 %v155, %v174
    %176 = vmatmul.f32.gmra.mxu0 %v130
    %v177 = vpop.f32.mrf.mxu0
    %v178 = vadd.f32 %v155, %v177
    %179 = vmatmul.f32.gmra.mxu0 %v131
    %v180 = vpop.f32.mrf.mxu0
    %v181 = vadd.f32 %v155, %v180
    %182 = vmatmul.f32.gmra.mxu0 %v132
    %v183 = vpop.f32.mrf.mxu0
    %v184 = vadd.f32 %v155, %v183
    %185 = vmatmul.f32.gmra.mxu0 %v133
    %v186 = vpop.f32.mrf.mxu0
    %v187 = vadd.f32 %v155, %v186
    %188 = vmatmul.f32.gmra.mxu0 %v134
    %v189 = vpop.f32.mrf.mxu0
    %v190 = vadd.f32 %v155, %v189
    %191 = vmatmul.f32.gmra.mxu0 %v135
    %v192 = vpop.f32.mrf.mxu0
    %v193 = vadd.f32 %v155, %v192
    %194 = vmatmul.f32.gmra.mxu0 %v136
    %v195 = vpop.f32.mrf.mxu0
    %v196 = vadd.f32 %v155, %v195
    %197 = vdwg.mxu0
    %v198 = vmax.f32 %v175, 0.0
    %v199 = vmax.f32 %v178, 0.0
    %v200 = vmax.f32 %v181, 0.0
    %v201 = vmax.f32 %v184, 0.0
    %v202 = vmax.f32 %v187, 0.0
    %v203 = vmax.f32 %v190, 0.0
    %v204 = vmax.f32 %v193, 0.0
    %v205 = vmax.f32 %v196, 0.0
    %vm206 = vcmask 523264
    %v208 = vsel %vm206, %v105, 0
    %v211 = vsel %vm206, %v106, 0
    %v214 = vsel %vm206, %v107, 0
    %v217 = vsel %vm206, %v108, 0
    %v220 = vsel %vm206, %v109, 0
    %v223 = vsel %vm206, %v110, 0
    %v226 = vsel %vm206, %v111, 0
    %v229 = vsel %vm206, %v112, 0
    %231 = vmatpush.msra.mxu0 0.0
    %232 = vmatpush.msra.mxu0 0.0
    %233 = vmatpush.msra.mxu0 0.0
    %234 = vmatpush.msra.mxu0 0.0
    %235 = vmatpush.msra.mxu0 0.0
    %236 = vmatpush.msra.mxu0 0.0
    %237 = vmatpush.msra.mxu0 0.0
    %238 = vmatpush.msra.mxu0 0.0
    %239 = vmatpush.msra.mxu0 %v205
    %240 = vmatpush.msra.mxu0 %v204
    %241 = vmatpush.msra.mxu0 %v203
    %242 = vmatpush.msra.mxu0 %v202
    %243 = vmatpush.msra.mxu0 %v201
    %244 = vmatpush.msra.mxu0 %v200
    %245 = vmatpush.msra.mxu0 %v199
    %246 = vmatpush.msra.mxu0 %v198
    %247 = vmatmul.f32.gmra.mxu0 %v208
    %v248 = vpop.f32.mrf.mxu0
    %v249 = vadd.f32 0.0, %v248
    %250 = vmatmul.f32.gmra.mxu0 %v211
    %v251 = vpop.f32.mrf.mxu0
    %v252 = vadd.f32 0.0, %v251
    %253 = vmatmul.f32.gmra.mxu0 %v214
    %v254 = vpop.f32.mrf.mxu0
    %v255 = vadd.f32 0.0, %v254
    %256 = vmatmul.f32.gmra.mxu0 %v217
    %v257 = vpop.f32.mrf.mxu0
    %v258 = vadd.f32 0.0, %v257
    %259 = vmatmul.f32.gmra.mxu0 %v220
    %v260 = vpop.f32.mrf.mxu0
    %v261 = vadd.f32 0.0, %v260
    %262 = vmatmul.f32.gmra.mxu0 %v223
    %v263 = vpop.f32.mrf.mxu0
    %v264 = vadd.f32 0.0, %v263
    %265 = vmatmul.f32.gmra.mxu0 %v226
    %v266 = vpop.f32.mrf.mxu0
    %v267 = vadd.f32 0.0, %v266
    %268 = vmatmul.f32.gmra.mxu0 %v229
    %v269 = vpop.f32.mrf.mxu0
    %v270 = vadd.f32 0.0, %v269
    %271 = vdwg.mxu0
    %272 = vmatpush.msra.mxu0 %v128
    %273 = vmatpush.msra.mxu0 %v127
    %274 = vmatpush.msra.mxu0 %v126
    %275 = vmatpush.msra.mxu0 %v125
    %276 = vmatpush.msra.mxu0 %v124
    %277 = vmatpush.msra.mxu0 %v123
    %278 = vmatpush.msra.mxu0 %v122
    %279 = vmatpush.msra.mxu0 %v121
    %280 = vmatpush.msra.mxu0 %v120
    %281 = vmatpush.msra.mxu0 %v119
    %282 = vmatpush.msra.mxu0 %v118
    %283 = vmatpush.msra.mxu0 %v117
    %284 = vmatpush.msra.mxu0 %v116
    %285 = vmatpush.msra.mxu0 %v115
    %286 = vmatpush.msra.mxu0 %v114
    %287 = vmatpush.msra.mxu0 %v113
    %288 = vmatmul.f32.gmra.mxu0 %v249
    %v289 = vpop.f32.mrf.mxu0
    %v290 = vadd.f32 0.0, %v289
    %291 = vmatmul.f32.gmra.mxu0 %v252
    %v292 = vpop.f32.mrf.mxu0
    %v293 = vadd.f32 0.0, %v292
    %294 = vmatmul.f32.gmra.mxu0 %v255
    %v295 = vpop.f32.mrf.mxu0
    %v296 = vadd.f32 0.0, %v295
    %297 = vmatmul.f32.gmra.mxu0 %v258
    %v298 = vpop.f32.mrf.mxu0
    %v299 = vadd.f32 0.0, %v298
    %300 = vmatmul.f32.gmra.mxu0 %v261
    %v301 = vpop.f32.mrf.mxu0
    %v302 = vadd.f32 0.0, %v301
    %303 = vmatmul.f32.gmra.mxu0 %v264
    %v304 = vpop.f32.mrf.mxu0
    %v305 = vadd.f32 0.0, %v304
    %306 = vmatmul.f32.gmra.mxu0 %v267
    %v307 = vpop.f32.mrf.mxu0
    %v308 = vadd.f32 0.0, %v307
    %309 = vmatmul.f32.gmra.mxu0 %v270
    %v310 = vpop.f32.mrf.mxu0
    %v311 = vadd.f32 0.0, %v310
    %312 = vdwg.mxu0
    %v313 = vmul.f32 %v198, 2.0
    %v314 = vmul.f32 %v199, 2.0
    %v315 = vmul.f32 %v200, 2.0
    %v316 = vmul.f32 %v201, 2.0
    %v317 = vmul.f32 %v202, 2.0
    %v318 = vmul.f32 %v203, 2.0
    %v319 = vmul.f32 %v204, 2.0
    %v320 = vmul.f32 %v205, 2.0
    %v321 = vadd.f32 %v313, %v290
    %v322 = vadd.f32 %v314, %v293
    %v323 = vadd.f32 %v315, %v296
    %v324 = vadd.f32 %v316, %v299
    %v325 = vadd.f32 %v317, %v302
    %v326 = vadd.f32 %v318, %v305
    %v327 = vadd.f32 %v319, %v308
    %v328 = vadd.f32 %v320, %v311
    %v329 = vmax.f32 %v321, 0.0
    %v330 = vmax.f32 %v322, 0.0
    %v331 = vmax.f32 %v323, 0.0
    %v332 = vmax.f32 %v324, 0.0
    %v333 = vmax.f32 %v325, 0.0
    %v334 = vmax.f32 %v326, 0.0
    %v335 = vmax.f32 %v327, 0.0
    %v336 = vmax.f32 %v328, 0.0
    %v337 = vsub.f32 %v329, %v198
    %v338 = vsub.f32 %v330, %v199
    %v339 = vsub.f32 %v331, %v200
    %v340 = vsub.f32 %v332, %v201
    %v341 = vsub.f32 %v333, %v202
    %v342 = vsub.f32 %v334, %v203
    %v343 = vsub.f32 %v335, %v204
    %v344 = vsub.f32 %v336, %v205
    %v345 = vadd.f32 %v198, %v337
    %v346 = vadd.f32 %v199, %v338
    %v347 = vadd.f32 %v200, %v339
    %v348 = vadd.f32 %v201, %v340
    %v349 = vadd.f32 %v202, %v341
    %v350 = vadd.f32 %v203, %v342
    %v351 = vadd.f32 %v204, %v343
    %v352 = vadd.f32 %v205, %v344
    %353 = vmatpush.msra.mxu0 0.0
    %354 = vmatpush.msra.mxu0 0.0
    %355 = vmatpush.msra.mxu0 0.0
    %356 = vmatpush.msra.mxu0 0.0
    %357 = vmatpush.msra.mxu0 0.0
    %358 = vmatpush.msra.mxu0 0.0
    %359 = vmatpush.msra.mxu0 0.0
    %360 = vmatpush.msra.mxu0 0.0
    %361 = vmatpush.msra.mxu0 %v352
    %362 = vmatpush.msra.mxu0 %v351
    %363 = vmatpush.msra.mxu0 %v350
    %364 = vmatpush.msra.mxu0 %v349
    %365 = vmatpush.msra.mxu0 %v348
    %366 = vmatpush.msra.mxu0 %v347
    %367 = vmatpush.msra.mxu0 %v346
    %368 = vmatpush.msra.mxu0 %v345
    %369 = vmatmul.f32.gmra.mxu0 %v208
    %v370 = vpop.f32.mrf.mxu0
    %v371 = vadd.f32 0.0, %v370
    %372 = vmatmul.f32.gmra.mxu0 %v211
    %v373 = vpop.f32.mrf.mxu0
    %v374 = vadd.f32 0.0, %v373
    %375 = vmatmul.f32.gmra.mxu0 %v214
    %v376 = vpop.f32.mrf.mxu0
    %v377 = vadd.f32 0.0, %v376
    %378 = vmatmul.f32.gmra.mxu0 %v217
    %v379 = vpop.f32.mrf.mxu0
    %v380 = vadd.f32 0.0, %v379
    %381 = vmatmul.f32.gmra.mxu0 %v220
    %v382 = vpop.f32.mrf.mxu0
    %v383 = vadd.f32 0.0, %v382
    %384 = vmatmul.f32.gmra.mxu0 %v223
    %v385 = vpop.f32.mrf.mxu0
    %v386 = vadd.f32 0.0, %v385
    %387 = vmatmul.f32.gmra.mxu0 %v226
    %v388 = vpop.f32.mrf.mxu0
    %v389 = vadd.f32 0.0, %v388
    %390 = vmatmul.f32.gmra.mxu0 %v229
    %v391 = vpop.f32.mrf.mxu0
    %v392 = vadd.f32 0.0, %v391
    %393 = vdwg.mxu0
    %394 = vmatpush.msra.mxu0 %v128
    %395 = vmatpush.msra.mxu0 %v127
    %396 = vmatpush.msra.mxu0 %v126
    %397 = vmatpush.msra.mxu0 %v125
    %398 = vmatpush.msra.mxu0 %v124
    %399 = vmatpush.msra.mxu0 %v123
    %400 = vmatpush.msra.mxu0 %v122
    %401 = vmatpush.msra.mxu0 %v121
    %402 = vmatpush.msra.mxu0 %v120
    %403 = vmatpush.msra.mxu0 %v119
    %404 = vmatpush.msra.mxu0 %v118
    %405 = vmatpush.msra.mxu0 %v117
    %406 = vmatpush.msra.mxu0 %v116
    %407 = vmatpush.msra.mxu0 %v115
    %408 = vmatpush.msra.mxu0 %v114
    %409 = vmatpush.msra.mxu0 %v113
    %410 = vmatmul.f32.gmra.mxu0 %v371
    %v411 = vpop.f32.mrf.mxu0
    %v412 = vadd.f32 0.0, %v411
    %413 = vmatmul.f32.gmra.mxu0 %v374
    %v414 = vpop.f32.mrf.mxu0
    %v415 = vadd.f32 0.0, %v414
    %416 = vmatmul.f32.gmra.mxu0 %v377
    %v417 = vpop.f32.mrf.mxu0
    %v418 = vadd.f32 0.0, %v417
    %419 = vmatmul.f32.gmra.mxu0 %v380
    %v420 = vpop.f32.mrf.mxu0
    %v421 = vadd.f32 0.0, %v420
    %422 = vmatmul.f32.gmra.mxu0 %v383
    %v423 = vpop.f32.mrf.mxu0
    %v424 = vadd.f32 0.0, %v423
    %425 = vmatmul.f32.gmra.mxu0 %v386
    %v426 = vpop.f32.mrf.mxu0
    %v427 = vadd.f32 0.0, %v426
    %428 = vmatmul.f32.gmra.mxu0 %v389
    %v429 = vpop.f32.mrf.mxu0
    %v430 = vadd.f32 0.0, %v429
    %431 = vmatmul.f32.gmra.mxu0 %v392
    %v432 = vpop.f32.mrf.mxu0
    %v433 = vadd.f32 0.0, %v432
    %434 = vdwg.mxu0
    %v435 = vmul.f32 %v345, 2.0
    %v436 = vmul.f32 %v346, 2.0
    %v437 = vmul.f32 %v347, 2.0
    %v438 = vmul.f32 %v348, 2.0
    %v439 = vmul.f32 %v349, 2.0
    %v440 = vmul.f32 %v350, 2.0
    %v441 = vmul.f32 %v351, 2.0
    %v442 = vmul.f32 %v352, 2.0
    %v443 = vadd.f32 %v435, %v412
    %v444 = vadd.f32 %v436, %v415
    %v445 = vadd.f32 %v437, %v418
    %v446 = vadd.f32 %v438, %v421
    %v447 = vadd.f32 %v439, %v424
    %v448 = vadd.f32 %v440, %v427
    %v449 = vadd.f32 %v441, %v430
    %v450 = vadd.f32 %v442, %v433
    %v451 = vmax.f32 %v443, 0.0
    %v452 = vmax.f32 %v444, 0.0
    %v453 = vmax.f32 %v445, 0.0
    %v454 = vmax.f32 %v446, 0.0
    %v455 = vmax.f32 %v447, 0.0
    %v456 = vmax.f32 %v448, 0.0
    %v457 = vmax.f32 %v449, 0.0
    %v458 = vmax.f32 %v450, 0.0
    %v459 = vsub.f32 %v451, %v345
    %v460 = vsub.f32 %v452, %v346
    %v461 = vsub.f32 %v453, %v347
    %v462 = vsub.f32 %v454, %v348
    %v463 = vsub.f32 %v455, %v349
    %v464 = vsub.f32 %v456, %v350
    %v465 = vsub.f32 %v457, %v351
    %v466 = vsub.f32 %v458, %v352
    %v467 = vadd.f32 %v345, %v459
    %v468 = vadd.f32 %v346, %v460
    %v469 = vadd.f32 %v347, %v461
    %v470 = vadd.f32 %v348, %v462
    %v471 = vadd.f32 %v349, %v463
    %v472 = vadd.f32 %v350, %v464
    %v473 = vadd.f32 %v351, %v465
    %v474 = vadd.f32 %v352, %v466
    %475 = vmatpush.msra.mxu0 0.0
    %476 = vmatpush.msra.mxu0 0.0
    %477 = vmatpush.msra.mxu0 0.0
    %478 = vmatpush.msra.mxu0 0.0
    %479 = vmatpush.msra.mxu0 0.0
    %480 = vmatpush.msra.mxu0 0.0
    %481 = vmatpush.msra.mxu0 0.0
    %482 = vmatpush.msra.mxu0 0.0
    %483 = vmatpush.msra.mxu0 %v474
    %484 = vmatpush.msra.mxu0 %v473
    %485 = vmatpush.msra.mxu0 %v472
    %486 = vmatpush.msra.mxu0 %v471
    %487 = vmatpush.msra.mxu0 %v470
    %488 = vmatpush.msra.mxu0 %v469
    %489 = vmatpush.msra.mxu0 %v468
    %490 = vmatpush.msra.mxu0 %v467
    %491 = vmatmul.f32.gmra.mxu0 %v208
    %v492 = vpop.f32.mrf.mxu0
    %v493 = vadd.f32 0.0, %v492
    %494 = vmatmul.f32.gmra.mxu0 %v211
    %v495 = vpop.f32.mrf.mxu0
    %v496 = vadd.f32 0.0, %v495
    %497 = vmatmul.f32.gmra.mxu0 %v214
    %v498 = vpop.f32.mrf.mxu0
    %v499 = vadd.f32 0.0, %v498
    %500 = vmatmul.f32.gmra.mxu0 %v217
    %v501 = vpop.f32.mrf.mxu0
    %v502 = vadd.f32 0.0, %v501
    %503 = vmatmul.f32.gmra.mxu0 %v220
    %v504 = vpop.f32.mrf.mxu0
    %v505 = vadd.f32 0.0, %v504
    %506 = vmatmul.f32.gmra.mxu0 %v223
    %v507 = vpop.f32.mrf.mxu0
    %v508 = vadd.f32 0.0, %v507
    %509 = vmatmul.f32.gmra.mxu0 %v226
    %v510 = vpop.f32.mrf.mxu0
    %v511 = vadd.f32 0.0, %v510
    %512 = vmatmul.f32.gmra.mxu0 %v229
    %v513 = vpop.f32.mrf.mxu0
    %v514 = vadd.f32 0.0, %v513
    %515 = vdwg.mxu0
    %516 = vmatpush.msra.mxu0 %v128
    %517 = vmatpush.msra.mxu0 %v127
    %518 = vmatpush.msra.mxu0 %v126
    %519 = vmatpush.msra.mxu0 %v125
    %520 = vmatpush.msra.mxu0 %v124
    %521 = vmatpush.msra.mxu0 %v123
    %522 = vmatpush.msra.mxu0 %v122
    %523 = vmatpush.msra.mxu0 %v121
    %524 = vmatpush.msra.mxu0 %v120
    %525 = vmatpush.msra.mxu0 %v119
    %526 = vmatpush.msra.mxu0 %v118
    %527 = vmatpush.msra.mxu0 %v117
    %528 = vmatpush.msra.mxu0 %v116
    %529 = vmatpush.msra.mxu0 %v115
    %530 = vmatpush.msra.mxu0 %v114
    %531 = vmatpush.msra.mxu0 %v113
    %532 = vmatmul.f32.gmra.mxu0 %v493
    %v533 = vpop.f32.mrf.mxu0
    %v534 = vadd.f32 0.0, %v533
    %535 = vmatmul.f32.gmra.mxu0 %v496
    %v536 = vpop.f32.mrf.mxu0
    %v537 = vadd.f32 0.0, %v536
    %538 = vmatmul.f32.gmra.mxu0 %v499
    %v539 = vpop.f32.mrf.mxu0
    %v540 = vadd.f32 0.0, %v539
    %541 = vmatmul.f32.gmra.mxu0 %v502
    %v542 = vpop.f32.mrf.mxu0
    %v543 = vadd.f32 0.0, %v542
    %544 = vmatmul.f32.gmra.mxu0 %v505
    %v545 = vpop.f32.mrf.mxu0
    %v546 = vadd.f32 0.0, %v545
    %547 = vmatmul.f32.gmra.mxu0 %v508
    %v548 = vpop.f32.mrf.mxu0
    %v549 = vadd.f32 0.0, %v548
    %550 = vmatmul.f32.gmra.mxu0 %v511
    %v551 = vpop.f32.mrf.mxu0
    %v552 = vadd.f32 0.0, %v551
    %553 = vmatmul.f32.gmra.mxu0 %v514
    %v554 = vpop.f32.mrf.mxu0
    %v555 = vadd.f32 0.0, %v554
    %556 = vdwg.mxu0
    %v557 = vmul.f32 %v467, 2.0
    %v558 = vmul.f32 %v468, 2.0
    %v559 = vmul.f32 %v469, 2.0
    %v560 = vmul.f32 %v470, 2.0
    %v561 = vmul.f32 %v471, 2.0
    %v562 = vmul.f32 %v472, 2.0
    %v563 = vmul.f32 %v473, 2.0
    %v564 = vmul.f32 %v474, 2.0
    %v565 = vadd.f32 %v557, %v534
    %v566 = vadd.f32 %v558, %v537
    %v567 = vadd.f32 %v559, %v540
    %v568 = vadd.f32 %v560, %v543
    %v569 = vadd.f32 %v561, %v546
    %v570 = vadd.f32 %v562, %v549
    %v571 = vadd.f32 %v563, %v552
    %v572 = vadd.f32 %v564, %v555
    %v573 = vmax.f32 %v565, 0.0
    %v574 = vmax.f32 %v566, 0.0
    %v575 = vmax.f32 %v567, 0.0
    %v576 = vmax.f32 %v568, 0.0
    %v577 = vmax.f32 %v569, 0.0
    %v578 = vmax.f32 %v570, 0.0
    %v579 = vmax.f32 %v571, 0.0
    %v580 = vmax.f32 %v572, 0.0
    %v581 = vsub.f32 %v573, %v467
    %v582 = vsub.f32 %v574, %v468
    %v583 = vsub.f32 %v575, %v469
    %v584 = vsub.f32 %v576, %v470
    %v585 = vsub.f32 %v577, %v471
    %v586 = vsub.f32 %v578, %v472
    %v587 = vsub.f32 %v579, %v473
    %v588 = vsub.f32 %v580, %v474
    %v589 = vadd.f32 %v467, %v581
    %v590 = vadd.f32 %v468, %v582
    %v591 = vadd.f32 %v469, %v583
    %v592 = vadd.f32 %v470, %v584
    %v593 = vadd.f32 %v471, %v585
    %v594 = vadd.f32 %v472, %v586
    %v595 = vadd.f32 %v473, %v587
    %v596 = vadd.f32 %v474, %v588
    %v597 = vld [vmem:[#allocation10] sm:$0xff]
    %v598 = vld [vmem:[#allocation10 + $0x8] sm:$0xff]
    %v599 = vld [vmem:[#allocation10 + $0x10] sm:$0xff]
    %v600 = vld [vmem:[#allocation10 + $0x18] sm:$0xff]
    %v601 = vld [vmem:[#allocation10 + $0x20] sm:$0xff]
    %v602 = vld [vmem:[#allocation10 + $0x28] sm:$0xff]
    %v603 = vld [vmem:[#allocation10 + $0x30] sm:$0xff]
    %v604 = vld [vmem:[#allocation10 + $0x38] sm:$0xff]
    %v605 = vld [vmem:[#allocation10 + $0x40] sm:$0xff]
    %v606 = vld [vmem:[#allocation10 + $0x48] sm:$0xff]
    %v607 = vld [vmem:[#allocation10 + $0x50] sm:$0xff]
    %v608 = vld [vmem:[#allocation10 + $0x58] sm:$0xff]
    %v609 = vld [vmem:[#allocation10 + $0x60] sm:$0xff]
    %v610 = vld [vmem:[#allocation10 + $0x68] sm:$0xff]
    %v611 = vld [vmem:[#allocation10 + $0x70] sm:$0xff]
    %v612 = vld [vmem:[#allocation10 + $0x78] sm:$0xff]
    %v613 = vld [vmem:[%s6] sm:$0x1]
    %v615 = vperm.slane %v613, 0
    %617 = vmatpush.msra.mxu0 %v612
    %618 = vmatpush.msra.mxu0 %v611
    %619 = vmatpush.msra.mxu0 %v610
    %620 = vmatpush.msra.mxu0 %v609
    %621 = vmatpush.msra.mxu0 %v608
    %622 = vmatpush.msra.mxu0 %v607
    %623 = vmatpush.msra.mxu0 %v606
    %624 = vmatpush.msra.mxu0 %v605
    %625 = vmatpush.msra.mxu0 %v604
    %626 = vmatpush.msra.mxu0 %v603
    %627 = vmatpush.msra.mxu0 %v602
    %628 = vmatpush.msra.mxu0 %v601
    %629 = vmatpush.msra.mxu0 %v600
    %630 = vmatpush.msra.mxu0 %v599
    %631 = vmatpush.msra.mxu0 %v598
    %632 = vmatpush.msra.mxu0 %v597
    %633 = vmatmul.f32.gmra.mxu0 %v589
    %v634 = vpop.f32.mrf.mxu0
    %v635 = vadd.f32 %v615, %v634
    %636 = vmatmul.f32.gmra.mxu0 %v590
    %v637 = vpop.f32.mrf.mxu0
    %v638 = vadd.f32 %v615, %v637
    %639 = vmatmul.f32.gmra.mxu0 %v591
    %v640 = vpop.f32.mrf.mxu0
    %v641 = vadd.f32 %v615, %v640
    %642 = vmatmul.f32.gmra.mxu0 %v592
    %v643 = vpop.f32.mrf.mxu0
    %v644 = vadd.f32 %v615, %v643
    %645 = vmatmul.f32.gmra.mxu0 %v593
    %v646 = vpop.f32.mrf.mxu0
    %v647 = vadd.f32 %v615, %v646
    %648 = vmatmul.f32.gmra.mxu0 %v594
    %v649 = vpop.f32.mrf.mxu0
    %v650 = vadd.f32 %v615, %v649
    %651 = vmatmul.f32.gmra.mxu0 %v595
    %v652 = vpop.f32.mrf.mxu0
    %v653 = vadd.f32 %v615, %v652
    %654 = vmatmul.f32.gmra.mxu0 %v596
    %v655 = vpop.f32.mrf.mxu0
    %v656 = vadd.f32 %v615, %v655
    %657 = vdwg.mxu0
    %658 = vst [vmem:[#allocation11] sm:$0xff] %v635
    %659 = vst [vmem:[#allocation11 + $0x8] sm:$0xff] %v638
    %660 = vst [vmem:[#allocation11 + $0x10] sm:$0xff] %v641
    %661 = vst [vmem:[#allocation11 + $0x18] sm:$0xff] %v644
    %662 = vst [vmem:[#allocation11 + $0x20] sm:$0xff] %v647
    %663 = vst [vmem:[#allocation11 + $0x28] sm:$0xff] %v650
    %664 = vst [vmem:[#allocation11 + $0x30] sm:$0xff] %v653
    %665 = vst [vmem:[#allocation11 + $0x38] sm:$0xff] %v656
    // Predicated region
    $region50: #{tpu_custom_call.1} parent=1 // pred_check
      _
    $region51: #{tpu_custom_call.1} parent=1 // pred_check_branch
      %667 = sbr.rel (0) target = $region53
    $region52: #{tpu_custom_call.1} parent=1 // pred_region
      %669 = vsyncadd [#allocation4], 0
      %s670 = sshll.u32 [#allocation11], 4
      %s671 = int_to_ptr.vmem [resolvable:$true] %s670
      %s672 = sshll.u32 %s7, 4
      %s673 = int_to_ptr.hbm [resolvable:$true] %s672
      %678 = dma.vmem_to_hbm [thread:$0]  %s671, 1024, %s673, [#allocation4], 128, 128, 8
    $region53: #{tpu_custom_call.1} parent=1 // pred_fallthru
      _
    // Predicated region
    $region54: #{tpu_custom_call.1} parent=1 // pred_check
      _
    $region55: #{tpu_custom_call.1} parent=1 // pred_check_branch
      %680 = sbr.rel (0) target = $region57
    $region56: #{tpu_custom_call.1} parent=1 // pred_region
      %682 = dma.done [#allocation4], 1024
    $region57: #{tpu_custom_call.1} parent=1 // pred_fallthru
      _
    %683 = vsyncpa [#allocation3], 1
    %684 = vsyncpa [#allocation6], 1
    %685 = vsyncpa [#allocation9], 1
    %686 = vsyncpa [#allocation4], 1

</llo_original>
